<compile_context>
chip_gen: v7x
topology: tpu7x:2x2x1
jax: 0.10.0
libtpu: 0.0.40
codegen_flags: <defaults>
</compile_context>

<pallas_src>
import functools

import jax
import jax.numpy as jnp
from jax.experimental import pallas as pl
from jax.experimental.pallas import tpu as pltpu

LOG_STD_MIN = -5.0
LOG_STD_MAX = 2.0
BN_EPS = 1e-5


def _bn_relu(h, gamma, beta):
    """BatchNorm1d (training mode: batch mean, biased variance) folded into a
    single per-feature scale/shift, followed by ReLU.  All math in f32.
    var = E[h^2] - mu^2 keeps the two reductions dependency-free."""
    mu = jnp.mean(h, axis=0, keepdims=True)
    ms = jnp.mean(h * h, axis=0, keepdims=True)
    var = ms - mu * mu
    scale = gamma * jax.lax.rsqrt(var + BN_EPS)   # rsqrt -> EUP slot
    shift = beta - mu * scale
    return jnp.maximum(h * scale + shift, 0.0)


def actor_kernel(x_ref, w1_ref, w2_ref, wh_ref, vec_ref, out_ref,
                 *, act_dim, hidden_dim):
    x = x_ref[...]                      # (B, obs)  f32
    vec = vec_ref[...]                  # (8, head_pad) packed per-feature vectors

    g1 = vec[0:1, :hidden_dim]
    b1 = vec[1:2, :hidden_dim]
    g2 = vec[2:3, :hidden_dim]
    b2 = vec[3:4, :hidden_dim]
    bh = vec[4:5, :]                    # fused head bias (mean | log_std | 0-pad)

    # --- MLP block 1: Linear(no bias) -> BatchNorm1d -> ReLU ---
    h = jnp.dot(x, w1_ref[...], preferred_element_type=jnp.float32)
    h = _bn_relu(h, g1, b1)

    # --- MLP block 2: Linear(no bias) -> BatchNorm1d -> ReLU ---
    h = jnp.dot(h, w2_ref[...], preferred_element_type=jnp.float32)
    h = _bn_relu(h, g2, b2)

    # --- fused heads: one matmul into a lane-dense (B, head_pad) slab ---
    #   cols [0, act_dim)         -> mean head
    #   cols [act_dim, 2*act_dim) -> log_std head
    #   remaining cols            -> zero padding (zero weights/bias)
    z = jnp.dot(h, wh_ref[...], preferred_element_type=jnp.float32) + bh

    t = jnp.tanh(z)                                     # tanh -> EUP slot
    log_std = LOG_STD_MIN + 0.5 * (LOG_STD_MAX - LOG_STD_MIN) * (t + 1.0)

    col = jax.lax.broadcasted_iota(jnp.int32, z.shape, 1)
    is_log_std = jnp.logical_and(col >= act_dim, col < 2 * act_dim)
    out_ref[...] = jnp.where(is_log_std, log_std, z).astype(out_ref.dtype)


def actor_forward(x, params):
    """x: (B, obs_dim) float32.  Returns (mean, log_std), each (B, act_dim)."""
    B = x.shape[0]
    obs_dim, hidden_dim = params["w1"].shape
    act_dim = params["wm"].shape[1]
    head_pad = params["wh"].shape[1]

    # 5 input DMAs total: x, w1, w2, fused-head weights, packed vectors.
    operands = (x, params["w1"], params["w2"], params["wh"], params["vec"])

    # Gridless call: every operand / the output is one whole-array VMEM block.
    vmem_spec = pl.BlockSpec(memory_space=pltpu.MemorySpace.VMEM)

    flops = 2 * B * (obs_dim * hidden_dim
                     + hidden_dim * hidden_dim
                     + hidden_dim * head_pad)
    bytes_accessed = sum(int(op.size) * 4 for op in operands) + B * head_pad * 4
    cost = pl.CostEstimate(flops=flops,
                           transcendentals=B * head_pad + 2 * hidden_dim,
                           bytes_accessed=bytes_accessed)

    out = pl.pallas_call(
        functools.partial(actor_kernel, act_dim=act_dim, hidden_dim=hidden_dim),
        out_shape=jax.ShapeDtypeStruct((B, head_pad), jnp.float32),
        in_specs=[vmem_spec] * len(operands),
        out_specs=vmem_spec,
        cost_estimate=cost,
    )(*operands)

    mean = out[:, :act_dim]
    log_std = out[:, act_dim:2 * act_dim]
    return mean, log_std


def init_actor_params(key, obs_dim, hidden_dim, act_dim, head_pad=128):
    """Deterministic synthetic parameters (shapes match the PyTorch module).

    Linear weights are stored as (in_features, out_features) so the kernel
    computes x @ W directly.  The two head weights/biases are packed into a
    zero-padded, 128-lane-wide slab (wh); the five per-feature vectors
    (g1, b1, g2, b2, head-bias) are packed into a single (8, head_pad) slab
    (vec) so the kernel takes one DMA instead of five."""
    ks = jax.random.split(key, 6)

    def uni(k, fan_in, shape):
        s = 1.0 / jnp.sqrt(fan_in)
        return jax.random.uniform(k, shape, jnp.float32, minval=-s, maxval=s)

    p = {
        # mlp[0]: Linear(obs_dim, hidden, bias=False)
        "w1": uni(ks[0], obs_dim, (obs_dim, hidden_dim)),
        # mlp[1]: BatchNorm1d(hidden) affine params
        "g1": jnp.ones((1, hidden_dim), jnp.float32),
        "b1": jnp.zeros((1, hidden_dim), jnp.float32),
        # mlp[3]: Linear(hidden, hidden, bias=False)
        "w2": uni(ks[1], hidden_dim, (hidden_dim, hidden_dim)),
        # mlp[4]: BatchNorm1d(hidden)
        "g2": jnp.ones((1, hidden_dim), jnp.float32),
        "b2": jnp.zeros((1, hidden_dim), jnp.float32),
        # fc_mean / fc_logstd: Linear(hidden, act_dim)
        "wm": uni(ks[2], hidden_dim, (hidden_dim, act_dim)),
        "bm": uni(ks[3], hidden_dim, (1, act_dim)),
        "ws": uni(ks[4], hidden_dim, (hidden_dim, act_dim)),
        "bs": uni(ks[5], hidden_dim, (1, act_dim)),
    }

    head_pad = max(head_pad, ((2 * act_dim + 127) // 128) * 128)

    # Fused head weight slab: [Wm | Ws | 0].
    wh = jnp.zeros((hidden_dim, head_pad), jnp.float32)
    wh = wh.at[:, :act_dim].set(p["wm"]).at[:, act_dim:2 * act_dim].set(p["ws"])
    p["wh"] = wh

    # Packed per-feature vector slab (one (8, head_pad) VMEM tile, one DMA):
    #   row 0: gamma1, row 1: beta1, row 2: gamma2, row 3: beta2,
    #   row 4: fused head bias [bm | bs | 0], rows 5-7: zero.
    vec = jnp.zeros((8, head_pad), jnp.float32)
    vec = vec.at[0, :hidden_dim].set(p["g1"][0])
    vec = vec.at[1, :hidden_dim].set(p["b1"][0])
    vec = vec.at[2, :hidden_dim].set(p["g2"][0])
    vec = vec.at[3, :hidden_dim].set(p["b2"][0])
    vec = vec.at[4, :act_dim].set(p["bm"][0])
    vec = vec.at[4, act_dim:2 * act_dim].set(p["bs"][0])
    p["vec"] = vec
    return p


def reference_forward(x, p):
    """Pure-JAX f32 reference of the PyTorch module's forward (training mode)."""
    def mm(a, b):
        return jnp.dot(a, b, preferred_element_type=jnp.float32)

    def bn(h, g, b):
        mu = jnp.mean(h, axis=0, keepdims=True)
        var = jnp.mean((h - mu) ** 2, axis=0, keepdims=True)
        return (h - mu) / jnp.sqrt(var + BN_EPS) * g + b

    h = jnp.maximum(bn(mm(x, p["w1"]), p["g1"], p["b1"]), 0.0)
    h = jnp.maximum(bn(mm(h, p["w2"]), p["g2"], p["b2"]), 0.0)
    mean = mm(h, p["wm"]) + p["bm"]
    log_std = jnp.tanh(mm(h, p["ws"]) + p["bs"])
    log_std = LOG_STD_MIN + 0.5 * (LOG_STD_MAX - LOG_STD_MIN) * (log_std + 1.0)
    return mean, log_std


if __name__ == "__main__":
    # Small shapes consistent with the module: obs vectors in, action stats out.
    B, OBS_DIM, HIDDEN_DIM, ACT_DIM = 8, 16, 32, 4

    key = jax.random.PRNGKey(0)
    k_params, k_x = jax.random.split(key)
    params = init_actor_params(k_params, OBS_DIM, HIDDEN_DIM, ACT_DIM)
    x = jax.random.normal(k_x, (B, OBS_DIM), jnp.float32)

    mean, log_std = actor_forward(x, params)
    jax.block_until_ready((mean, log_std))

    assert mean.shape == (B, ACT_DIM) and log_std.shape == (B, ACT_DIM)

    # Check against the full-f32 reference (kernel matmuls are f32 now).
    m_ref, ls_ref = reference_forward(x, params)
    assert jnp.allclose(mean, m_ref, atol=2e-2, rtol=2e-2)
    assert jnp.allclose(log_std, ls_ref, atol=2e-2, rtol=2e-2)

    assert bool(jnp.all(log_std >= LOG_STD_MIN)) and bool(jnp.all(log_std <= LOG_STD_MAX))

    print("KERNEL_OK")
</pallas_src>

<mosaic_0001>
module attributes {stable_mosaic.version = 11 : i64} {
  func.func @actor_kernel(%arg0: memref<8x16xf32, #tpu.memory_space<vmem>>, %arg1: memref<16x32xf32, #tpu.memory_space<vmem>>, %arg2: memref<32x32xf32, #tpu.memory_space<vmem>>, %arg3: memref<32x128xf32, #tpu.memory_space<vmem>>, %arg4: memref<8x128xf32, #tpu.memory_space<vmem>>, %arg5: memref<8x128xf32, #tpu.memory_space<vmem>>) attributes {dimension_semantics = [], scalar_prefetch = 0 : i64, scratch_operands = 0 : i64, tpu.core_type = #tpu.core_type<tc>} {
    %c0 = arith.constant 0 : index
    %c0_0 = arith.constant 0 : index
    %0 = vector.load %arg0[%c0, %c0_0] : memref<8x16xf32, #tpu.memory_space<vmem>>, vector<8x16xf32>
    %c0_1 = arith.constant 0 : index
    %c0_2 = arith.constant 0 : index
    %1 = vector.load %arg4[%c0_1, %c0_2] : memref<8x128xf32, #tpu.memory_space<vmem>>, vector<8x128xf32>
    %2 = vector.extract_strided_slice %1 {offsets = [0, 0], sizes = [1, 32], strides = [1, 1]} : vector<8x128xf32> to vector<1x32xf32>
    %3 = vector.extract_strided_slice %1 {offsets = [1, 0], sizes = [1, 32], strides = [1, 1]} : vector<8x128xf32> to vector<1x32xf32>
    %4 = vector.extract_strided_slice %1 {offsets = [2, 0], sizes = [1, 32], strides = [1, 1]} : vector<8x128xf32> to vector<1x32xf32>
    %5 = vector.extract_strided_slice %1 {offsets = [3, 0], sizes = [1, 32], strides = [1, 1]} : vector<8x128xf32> to vector<1x32xf32>
    %6 = vector.extract_strided_slice %1 {offsets = [4, 0], sizes = [1, 128], strides = [1, 1]} : vector<8x128xf32> to vector<1x128xf32>
    %c0_3 = arith.constant 0 : index
    %c0_4 = arith.constant 0 : index
    %7 = vector.load %arg1[%c0_3, %c0_4] : memref<16x32xf32, #tpu.memory_space<vmem>>, vector<16x32xf32>
    %cst = arith.constant dense<0.000000e+00> : vector<8x32xf32>
    %8 = tpu.matmul %0, %7, %cst {dimension_numbers = #tpu.dot_dimension_numbers<[1], [0], [0], [1], [0, 0, 1, 1], [], []>} : vector<8x16xf32>, vector<16x32xf32>, vector<8x32xf32> -> vector<8x32xf32>
    %cst_5 = arith.constant dense<0.000000e+00> : vector<32xf32>
    %9 = vector.multi_reduction <add>, %8, %cst_5 [0] : vector<8x32xf32> to vector<32xf32>
    %10 = vector.shape_cast %9 : vector<32xf32> to vector<1x32xf32>
    %cst_6 = arith.constant 8.000000e+00 : f32
    %11 = vector.broadcast %cst_6 : f32 to vector<1x32xf32>
    %12 = arith.divf %10, %11 : vector<1x32xf32>
    %13 = arith.mulf %8, %8 : vector<8x32xf32>
    %cst_7 = arith.constant dense<0.000000e+00> : vector<32xf32>
    %14 = vector.multi_reduction <add>, %13, %cst_7 [0] : vector<8x32xf32> to vector<32xf32>
    %15 = vector.shape_cast %14 : vector<32xf32> to vector<1x32xf32>
    %cst_8 = arith.constant 8.000000e+00 : f32
    %16 = vector.broadcast %cst_8 : f32 to vector<1x32xf32>
    %17 = arith.divf %15, %16 : vector<1x32xf32>
    %18 = arith.mulf %12, %12 : vector<1x32xf32>
    %19 = arith.subf %17, %18 : vector<1x32xf32>
    %cst_9 = arith.constant 9.99999974E-6 : f32
    %20 = vector.broadcast %cst_9 : f32 to vector<1x32xf32>
    %21 = arith.addf %19, %20 : vector<1x32xf32>
    %22 = math.rsqrt %21 : vector<1x32xf32>
    %23 = arith.mulf %2, %22 : vector<1x32xf32>
    %24 = arith.mulf %12, %23 : vector<1x32xf32>
    %25 = arith.subf %3, %24 : vector<1x32xf32>
    %26 = vector.broadcast %23 : vector<1x32xf32> to vector<8x32xf32>
    %27 = arith.mulf %8, %26 : vector<8x32xf32>
    %28 = vector.broadcast %25 : vector<1x32xf32> to vector<8x32xf32>
    %29 = arith.addf %27, %28 : vector<8x32xf32>
    %cst_10 = arith.constant 0.000000e+00 : f32
    %30 = vector.broadcast %cst_10 : f32 to vector<8x32xf32>
    %31 = arith.maximumf %29, %30 : vector<8x32xf32>
    %c0_11 = arith.constant 0 : index
    %c0_12 = arith.constant 0 : index
    %32 = vector.load %arg2[%c0_11, %c0_12] : memref<32x32xf32, #tpu.memory_space<vmem>>, vector<32x32xf32>
    %cst_13 = arith.constant dense<0.000000e+00> : vector<8x32xf32>
    %33 = tpu.matmul %31, %32, %cst_13 {dimension_numbers = #tpu.dot_dimension_numbers<[1], [0], [0], [1], [0, 0, 1, 1], [], []>} : vector<8x32xf32>, vector<32x32xf32>, vector<8x32xf32> -> vector<8x32xf32>
    %cst_14 = arith.constant dense<0.000000e+00> : vector<32xf32>
    %34 = vector.multi_reduction <add>, %33, %cst_14 [0] : vector<8x32xf32> to vector<32xf32>
    %35 = vector.shape_cast %34 : vector<32xf32> to vector<1x32xf32>
    %cst_15 = arith.constant 8.000000e+00 : f32
    %36 = vector.broadcast %cst_15 : f32 to vector<1x32xf32>
    %37 = arith.divf %35, %36 : vector<1x32xf32>
    %38 = arith.mulf %33, %33 : vector<8x32xf32>
    %cst_16 = arith.constant dense<0.000000e+00> : vector<32xf32>
    %39 = vector.multi_reduction <add>, %38, %cst_16 [0] : vector<8x32xf32> to vector<32xf32>
    %40 = vector.shape_cast %39 : vector<32xf32> to vector<1x32xf32>
    %cst_17 = arith.constant 8.000000e+00 : f32
    %41 = vector.broadcast %cst_17 : f32 to vector<1x32xf32>
    %42 = arith.divf %40, %41 : vector<1x32xf32>
    %43 = arith.mulf %37, %37 : vector<1x32xf32>
    %44 = arith.subf %42, %43 : vector<1x32xf32>
    %cst_18 = arith.constant 9.99999974E-6 : f32
    %45 = vector.broadcast %cst_18 : f32 to vector<1x32xf32>
    %46 = arith.addf %44, %45 : vector<1x32xf32>
    %47 = math.rsqrt %46 : vector<1x32xf32>
    %48 = arith.mulf %4, %47 : vector<1x32xf32>
    %49 = arith.mulf %37, %48 : vector<1x32xf32>
    %50 = arith.subf %5, %49 : vector<1x32xf32>
    %51 = vector.broadcast %48 : vector<1x32xf32> to vector<8x32xf32>
    %52 = arith.mulf %33, %51 : vector<8x32xf32>
    %53 = vector.broadcast %50 : vector<1x32xf32> to vector<8x32xf32>
    %54 = arith.addf %52, %53 : vector<8x32xf32>
    %cst_19 = arith.constant 0.000000e+00 : f32
    %55 = vector.broadcast %cst_19 : f32 to vector<8x32xf32>
    %56 = arith.maximumf %54, %55 : vector<8x32xf32>
    %c0_20 = arith.constant 0 : index
    %c0_21 = arith.constant 0 : index
    %57 = vector.load %arg3[%c0_20, %c0_21] : memref<32x128xf32, #tpu.memory_space<vmem>>, vector<32x128xf32>
    %cst_22 = arith.constant dense<0.000000e+00> : vector<8x128xf32>
    %58 = tpu.matmul %56, %57, %cst_22 {dimension_numbers = #tpu.dot_dimension_numbers<[1], [0], [0], [1], [0, 0, 1, 1], [], []>} : vector<8x32xf32>, vector<32x128xf32>, vector<8x128xf32> -> vector<8x128xf32>
    %59 = vector.broadcast %6 : vector<1x128xf32> to vector<8x128xf32>
    %60 = arith.addf %58, %59 : vector<8x128xf32>
    %61 = math.tanh %60 : vector<8x128xf32>
    %cst_23 = arith.constant 1.000000e+00 : f32
    %62 = vector.broadcast %cst_23 : f32 to vector<8x128xf32>
    %63 = arith.addf %61, %62 : vector<8x128xf32>
    %cst_24 = arith.constant 3.500000e+00 : f32
    %64 = vector.broadcast %cst_24 : f32 to vector<8x128xf32>
    %65 = arith.mulf %64, %63 : vector<8x128xf32>
    %cst_25 = arith.constant -5.000000e+00 : f32
    %66 = vector.broadcast %cst_25 : f32 to vector<8x128xf32>
    %67 = arith.addf %66, %65 : vector<8x128xf32>
    %68 = tpu.iota {dimensions = array<i32: 1>} : vector<8x128xi32>
    %c4_i32 = arith.constant 4 : i32
    %69 = vector.broadcast %c4_i32 : i32 to vector<8x128xi32>
    %70 = arith.cmpi sge, %68, %69 : vector<8x128xi32>
    %c8_i32 = arith.constant 8 : i32
    %71 = vector.broadcast %c8_i32 : i32 to vector<8x128xi32>
    %72 = arith.cmpi slt, %68, %71 : vector<8x128xi32>
    %73 = arith.andi %70, %72 : vector<8x128xi1>
    %74 = arith.select %73, %67, %60 : vector<8x128xi1>, vector<8x128xf32>
    %c0_26 = arith.constant 0 : index
    %c0_27 = arith.constant 0 : index
    %75 = vector.load %arg5[%c0_26, %c0_27] : memref<8x128xf32, #tpu.memory_space<vmem>>, vector<8x128xf32>
    tpu.vector_store %arg5[%c0_26, %c0_27], %74 {strides = array<i32>} : memref<8x128xf32, #tpu.memory_space<vmem>>, vector<8x128xf32>,
    return
  }
}

</mosaic_0001>

<llo_original>
// kernel: tpu_custom_call.1
$region0: #{tpu_custom_call.1}
  #allocation0 [shape = 'u32[]', space=smem, size = 0x4, offset = 0x4, fixed_abs, tag = 'smem constant byte address 0x4 - core index']
  #allocation1 [shape = 'u32[144,128]{1,0:T(1,128)}', space=vmem, size = 0x12000, scoped, tag = 'internal scratch']
  %s0 = inlined_call_operand.hbm [shape: f32[8,16], index: 0, kind: input, shape index: {}]
  %s1 = inlined_call_operand.hbm [shape: f32[16,32], index: 1, kind: input, shape index: {}]
  %s2 = inlined_call_operand.hbm [shape: f32[32,32], index: 2, kind: input, shape index: {}]
  %s3 = inlined_call_operand.hbm [shape: f32[32,128], index: 3, kind: input, shape index: {}]
  %s4 = inlined_call_operand.vmem [shape: f32[8,128], index: 4, kind: input, shape index: {}]
  %s5 = inlined_call_operand.hbm [shape: f32[8,128], index: 5, kind: output, shape index: {}]
  %s6 = sld [smem:[#allocation0]]
  $region46: #{tpu_custom_call.1} parent=0
    _
  %s8 = ssub.s32 1, %s6
  %s9 = scalar_select 0, %s8, %s6
  $region1: #{tpu_custom_call.1} parent=0
    #allocation2 [shape = 'u8[4096]{0}', space=vmem, size = 0x1000, scoped, tag = 'input window, operand 0, single buffered']
    #allocation3 [shape = 's32[1]{0}', space=sflag, size = 0x4, scoped, tag = 'scoped memory for tpu_custom_call.1']
    #allocation4 [shape = 's32[1]{0}', space=sflag, size = 0x4, scoped, tag = 'scoped memory for tpu_custom_call.1']
    #allocation5 [shape = 'u8[8192]{0}', space=vmem, size = 0x2000, scoped, tag = 'input window, operand 1, single buffered']
    #allocation6 [shape = 's32[1]{0}', space=sflag, size = 0x4, scoped, tag = 'scoped memory for tpu_custom_call.1']
    #allocation7 [shape = 'u8[16384]{0}', space=vmem, size = 0x4000, scoped, tag = 'input window, operand 2, single buffered']
    #allocation8 [shape = 'u8[16384]{0}', space=vmem, size = 0x4000, scoped, tag = 'input window, operand 3, single buffered']
    #allocation9 [shape = 's32[1]{0}', space=sflag, size = 0x4, scoped, tag = 'scoped memory for tpu_custom_call.1']
    #allocation10 [shape = 'u8[4096]{0}', space=vmem, size = 0x1000, scoped, tag = 'output window, operand 0, single buffered']
    %10 = vsyncpa [#allocation3], 0
    %11 = vsyncpa [#allocation6], 0
    %12 = vsyncpa [#allocation9], 0
    %13 = vsyncpa [#allocation4], 0
    // Predicated region
    $region2: #{tpu_custom_call.1} parent=1 // pred_check
      _
    $region3: #{tpu_custom_call.1} parent=1 // pred_check_branch
      %15 = sbr.rel (0) target = $region5
    $region4: #{tpu_custom_call.1} parent=1 // pred_region
      %s17 = ssub.s32 128, 128
      %18 = vsyncadd [#allocation3], %s17
      %s20 = sshll.u32 [#allocation2], 4
      %s21 = int_to_ptr.vmem [resolvable:$true] %s20
      %23 = dma.hbm_to_vmem [thread:$0]  %s0, 128, %s21, [#allocation3]
    $region5: #{tpu_custom_call.1} parent=1 // pred_fallthru
      _
    // Predicated region
    $region6: #{tpu_custom_call.1} parent=1 // pred_check
      _
    $region7: #{tpu_custom_call.1} parent=1 // pred_check_branch
      %25 = sbr.rel (0) target = $region9
    $region8: #{tpu_custom_call.1} parent=1 // pred_region
      %s27 = ssub.s32 256, 256
      %28 = vsyncadd [#allocation6], %s27
      %s29 = sshll.u32 [#allocation5], 4
      %s30 = int_to_ptr.vmem [resolvable:$true] %s29
      %35 = dma.hbm_to_vmem [thread:$0]  %s1, 256, %s30, [#allocation6], 128, 128, 8
    $region9: #{tpu_custom_call.1} parent=1 // pred_fallthru
      _
    // Predicated region
    $region10: #{tpu_custom_call.1} parent=1 // pred_check
      _
    $region11: #{tpu_custom_call.1} parent=1 // pred_check_branch
      %37 = sbr.rel (0) target = $region13
    $region12: #{tpu_custom_call.1} parent=1 // pred_region
      %s39 = ssub.s32 512, 512
      %40 = vsyncadd [#allocation6], %s39
      %s41 = sshll.u32 [#allocation7], 4
      %s42 = int_to_ptr.vmem [resolvable:$true] %s41
      %47 = dma.hbm_to_vmem [thread:$0]  %s2, 512, %s42, [#allocation6], 128, 128, 8
    $region13: #{tpu_custom_call.1} parent=1 // pred_fallthru
      _
    // Predicated region
    $region14: #{tpu_custom_call.1} parent=1 // pred_check
      _
    $region15: #{tpu_custom_call.1} parent=1 // pred_check_branch
      %49 = sbr.rel (0) target = $region17
    $region16: #{tpu_custom_call.1} parent=1 // pred_region
      %s51 = ssub.s32 512, 512
      %52 = vsyncadd [#allocation9], %s51
      %s53 = sshll.u32 [#allocation8], 4
      %s54 = int_to_ptr.vmem [resolvable:$true] %s53
      %59 = dma.hbm_to_vmem [thread:$0]  %s3, 512, %s54, [#allocation9], 128, 128, 8
    $region17: #{tpu_custom_call.1} parent=1 // pred_fallthru
      _
    // Predicated region
    $region18: #{tpu_custom_call.1} parent=1 // pred_check
      _
    $region19: #{tpu_custom_call.1} parent=1 // pred_check_branch
      %61 = sbr.rel (0) target = $region21
    $region20: #{tpu_custom_call.1} parent=1 // pred_region
      _
    $region21: #{tpu_custom_call.1} parent=1 // pred_fallthru
      _
    // Predicated region
    $region22: #{tpu_custom_call.1} parent=1 // pred_check
      _
    $region23: #{tpu_custom_call.1} parent=1 // pred_check_branch
      %63 = sbr.rel (0) target = $region25
    $region24: #{tpu_custom_call.1} parent=1 // pred_region
      %64 = dma.done [#allocation3], 128
    $region25: #{tpu_custom_call.1} parent=1 // pred_fallthru
      _
    // Predicated region
    $region26: #{tpu_custom_call.1} parent=1 // pred_check
      _
    $region27: #{tpu_custom_call.1} parent=1 // pred_check_branch
      %66 = sbr.rel (0) target = $region29
    $region28: #{tpu_custom_call.1} parent=1 // pred_region
      %67 = dma.done [#allocation6], 256
    $region29: #{tpu_custom_call.1} parent=1 // pred_fallthru
      _
    // Predicated region
    $region30: #{tpu_custom_call.1} parent=1 // pred_check
      _
    $region31: #{tpu_custom_call.1} parent=1 // pred_check_branch
      %69 = sbr.rel (0) target = $region33
    $region32: #{tpu_custom_call.1} parent=1 // pred_region
      %70 = dma.done [#allocation6], 512
    $region33: #{tpu_custom_call.1} parent=1 // pred_fallthru
      _
    // Predicated region
    $region34: #{tpu_custom_call.1} parent=1 // pred_check
      _
    $region35: #{tpu_custom_call.1} parent=1 // pred_check_branch
      %72 = sbr.rel (0) target = $region37
    $region36: #{tpu_custom_call.1} parent=1 // pred_region
      %73 = dma.done [#allocation9], 512
    $region37: #{tpu_custom_call.1} parent=1 // pred_fallthru
      _
    %v74 = vld [vmem:[#allocation2] sm:$0xff]
    %v75 = vld [vmem:[%s4] sm:$0xff]
    %v76 = vld [vmem:[#allocation5] sm:$0xff]
    %v77 = vld [vmem:[#allocation5 + $0x8] sm:$0xff]
    %vm78 = vcmask 130048
    %v80 = vsel %vm78, %v74, 0
    %82 = vmatprep.subr.mxu0 0.0
    %83 = vmatpush1.msra.mxu0 %v76
    %84 = vmatprep.subr.mxu0 0.0
    %85 = vmatpush1.msra.mxu0 %v77
    %86 = vmatprep.subr.mxu0 0.0
    %87 = vmatpush1.msra.mxu0 0.0
    %88 = vmatprep.subr.mxu0 0.0
    %89 = vmatpush1.msra.mxu0 0.0
    %90 = vmatprep.subr.mxu0 0.0
    %91 = vmatpush1.msra.mxu0 0.0
    %92 = vmatprep.subr.mxu0 0.0
    %93 = vmatpush1.msra.mxu0 0.0
    %94 = vmatprep.subr.mxu0 0.0
    %95 = vmatpush1.msra.mxu0 0.0
    %96 = vmatprep.subr.mxu0 0.0
    %97 = vmatpush1.msra.mxu0 0.0
    %98 = vmatprep.subr.mxu0 0.0
    %99 = vmatpush1.msra.mxu0 0.0
    %100 = vmatprep.subr.mxu0 0.0
    %101 = vmatpush1.msra.mxu0 0.0
    %102 = vmatprep.subr.mxu0 0.0
    %103 = vmatpush1.msra.mxu0 0.0
    %104 = vmatprep.subr.mxu0 0.0
    %105 = vmatpush1.msra.mxu0 0.0
    %106 = vmatprep.subr.mxu0 0.0
    %107 = vmatpush1.msra.mxu0 0.0
    %108 = vmatprep.subr.mxu0 0.0
    %109 = vmatpush1.msra.mxu0 0.0
    %110 = vmatprep.subr.mxu0 0.0
    %111 = vmatpush1.msra.mxu0 0.0
    %112 = vmatprep.subr.mxu0 0.0
    %113 = vmatpush1.msra.mxu0 0.0
    %114 = vmatprep.subr.mxu0 0.0
    %115 = vmatpush1.msra.mxu0 0.0
    %116 = vmatprep.subr.mxu0 0.0
    %117 = vmatpush1.msra.mxu0 0.0
    %118 = vmatprep.subr.mxu0 0.0
    %119 = vmatpush1.msra.mxu0 0.0
    %120 = vmatprep.subr.mxu0 0.0
    %121 = vmatpush1.msra.mxu0 0.0
    %122 = vmatprep.subr.mxu0 0.0
    %123 = vmatpush1.msra.mxu0 0.0
    %124 = vmatprep.subr.mxu0 0.0
    %125 = vmatpush1.msra.mxu0 0.0
    %126 = vmatprep.subr.mxu0 0.0
    %127 = vmatpush1.msra.mxu0 0.0
    %128 = vmatprep.subr.mxu0 0.0
    %129 = vmatpush1.msra.mxu0 0.0
    %130 = vmatprep.subr.mxu0 0.0
    %131 = vmatpush1.msra.mxu0 0.0
    %132 = vmatprep.subr.mxu0 0.0
    %133 = vmatpush1.msra.mxu0 0.0
    %134 = vmatprep.subr.mxu0 0.0
    %135 = vmatpush1.msra.mxu0 0.0
    %136 = vmatprep.subr.mxu0 0.0
    %137 = vmatpush1.msra.mxu0 0.0
    %138 = vmatprep.subr.mxu0 0.0
    %139 = vmatpush1.msra.mxu0 0.0
    %140 = vmatprep.subr.mxu0 0.0
    %141 = vmatpush1.msra.mxu0 0.0
    %142 = vmatprep.subr.mxu0 0.0
    %143 = vmatpush1.msra.mxu0 0.0
    %144 = vmatprep.subr.mxu0 0.0
    %145 = vmatpush1.msra.mxu0 0.0
    %146 = vmatprep.mubr.f32.mxu0 0.0
    %147 = vmatmul.mubr.f32.gmra.mrb[0].mxu0 %v80
    %v148 = vpop.f32.mrb[0].mxu0
    %v149 = vadd.f32 0.0, %v148
    %v150 = vpop.f32.mrb[0].mxu0
    %151 = vdwg.mxu0
    %vm152 = vcmask 261120
    %v153 = vsel %vm152, %v149, 0.0
    %v154 = vrot.slane %v153, 4
    %v155 = vadd.f32 %v153, %v154
    %v156 = vrot.slane %v155, 2
    %v157 = vadd.f32 %v155, %v156
    %v158 = vrot.slane %v157, 1
    %v159 = vadd.f32 %v157, %v158
    %v160 = vrcp.pop 8.0
    %v161 = vmul.f32 %v159, %v160
    %v162 = vmul.f32 %v149, %v149
    %v163 = vsel %vm152, %v162, 0.0
    %v164 = vrot.slane %v163, 4
    %v165 = vadd.f32 %v163, %v164
    %v166 = vrot.slane %v165, 2
    %v167 = vadd.f32 %v165, %v166
    %v168 = vrot.slane %v167, 1
    %v169 = vadd.f32 %v167, %v168
    %v170 = vmul.f32 %v169, %v160
    %v171 = vmul.f32 %v161, %v161
    %v172 = vsub.f32 %v170, %v171
    %v173 = vadd.f32 %v172, 1e-05
    %v174 = vrsqrt.pop %v173
    %v175 = vmul.f32 %v75, %v174
    %v176 = vmul.f32 %v161, %v175
    %v178 = vrot.slane %v176, 7
    %v180 = vsub.f32 %v75, %v178
    %v181 = vlaneseq
    %v182 = vshrl.u32 %v181, 7
    %v183 = vsub.s32 0, %v182
    %v184 = vrot.slane %v175, %v183
    %v185 = vmul.f32 %v149, %v184
    %v186 = vlaneseq
    %v187 = vshrl.u32 %v186, 7
    %v188 = vsub.s32 1, %v187
    %v189 = vrot.slane %v180, %v188
    %v190 = vadd.f32 %v185, %v189
    %v191 = vmax.f32 %v190, 0.0
    %v192 = vld [vmem:[#allocation7] sm:$0xff]
    %v193 = vld [vmem:[#allocation7 + $0x8] sm:$0xff]
    %v194 = vld [vmem:[#allocation7 + $0x10] sm:$0xff]
    %v195 = vld [vmem:[#allocation7 + $0x18] sm:$0xff]
    %v197 = vsel %vm152, %v191, 0
    %199 = vmatprep.subr.mxu0 0.0
    %200 = vmatpush1.msra.mxu0 %v192
    %201 = vmatprep.subr.mxu0 0.0
    %202 = vmatpush1.msra.mxu0 %v193
    %203 = vmatprep.subr.mxu0 0.0
    %204 = vmatpush1.msra.mxu0 %v194
    %205 = vmatprep.subr.mxu0 0.0
    %206 = vmatpush1.msra.mxu0 %v195
    %207 = vmatprep.subr.mxu0 0.0
    %208 = vmatpush1.msra.mxu0 0.0
    %209 = vmatprep.subr.mxu0 0.0
    %210 = vmatpush1.msra.mxu0 0.0
    %211 = vmatprep.subr.mxu0 0.0
    %212 = vmatpush1.msra.mxu0 0.0
    %213 = vmatprep.subr.mxu0 0.0
    %214 = vmatpush1.msra.mxu0 0.0
    %215 = vmatprep.subr.mxu0 0.0
    %216 = vmatpush1.msra.mxu0 0.0
    %217 = vmatprep.subr.mxu0 0.0
    %218 = vmatpush1.msra.mxu0 0.0
    %219 = vmatprep.subr.mxu0 0.0
    %220 = vmatpush1.msra.mxu0 0.0
    %221 = vmatprep.subr.mxu0 0.0
    %222 = vmatpush1.msra.mxu0 0.0
    %223 = vmatprep.subr.mxu0 0.0
    %224 = vmatpush1.msra.mxu0 0.0
    %225 = vmatprep.subr.mxu0 0.0
    %226 = vmatpush1.msra.mxu0 0.0
    %227 = vmatprep.subr.mxu0 0.0
    %228 = vmatpush1.msra.mxu0 0.0
    %229 = vmatprep.subr.mxu0 0.0
    %230 = vmatpush1.msra.mxu0 0.0
    %231 = vmatprep.subr.mxu0 0.0
    %232 = vmatpush1.msra.mxu0 0.0
    %233 = vmatprep.subr.mxu0 0.0
    %234 = vmatpush1.msra.mxu0 0.0
    %235 = vmatprep.subr.mxu0 0.0
    %236 = vmatpush1.msra.mxu0 0.0
    %237 = vmatprep.subr.mxu0 0.0
    %238 = vmatpush1.msra.mxu0 0.0
    %239 = vmatprep.subr.mxu0 0.0
    %240 = vmatpush1.msra.mxu0 0.0
    %241 = vmatprep.subr.mxu0 0.0
    %242 = vmatpush1.msra.mxu0 0.0
    %243 = vmatprep.subr.mxu0 0.0
    %244 = vmatpush1.msra.mxu0 0.0
    %245 = vmatprep.subr.mxu0 0.0
    %246 = vmatpush1.msra.mxu0 0.0
    %247 = vmatprep.subr.mxu0 0.0
    %248 = vmatpush1.msra.mxu0 0.0
    %249 = vmatprep.subr.mxu0 0.0
    %250 = vmatpush1.msra.mxu0 0.0
    %251 = vmatprep.subr.mxu0 0.0
    %252 = vmatpush1.msra.mxu0 0.0
    %253 = vmatprep.subr.mxu0 0.0
    %254 = vmatpush1.msra.mxu0 0.0
    %255 = vmatprep.subr.mxu0 0.0
    %256 = vmatpush1.msra.mxu0 0.0
    %257 = vmatprep.subr.mxu0 0.0
    %258 = vmatpush1.msra.mxu0 0.0
    %259 = vmatprep.subr.mxu0 0.0
    %260 = vmatpush1.msra.mxu0 0.0
    %261 = vmatprep.subr.mxu0 0.0
    %262 = vmatpush1.msra.mxu0 0.0
    %263 = vmatprep.mubr.f32.mxu0 0.0
    %264 = vmatmul.mubr.f32.gmra.mrb[0].mxu0 %v197
    %v265 = vpop.f32.mrb[0].mxu0
    %v266 = vadd.f32 0.0, %v265
    %v267 = vpop.f32.mrb[0].mxu0
    %268 = vdwg.mxu0
    %v269 = vsel %vm152, %v266, 0.0
    %v270 = vrot.slane %v269, 4
    %v271 = vadd.f32 %v269, %v270
    %v272 = vrot.slane %v271, 2
    %v273 = vadd.f32 %v271, %v272
    %v274 = vrot.slane %v273, 1
    %v275 = vadd.f32 %v273, %v274
    %v276 = vmul.f32 %v275, %v160
    %v277 = vmul.f32 %v266, %v266
    %v278 = vsel %vm152, %v277, 0.0
    %v279 = vrot.slane %v278, 4
    %v280 = vadd.f32 %v278, %v279
    %v281 = vrot.slane %v280, 2
    %v282 = vadd.f32 %v280, %v281
    %v283 = vrot.slane %v282, 1
    %v284 = vadd.f32 %v282, %v283
    %v285 = vmul.f32 %v284, %v160
    %v286 = vmul.f32 %v276, %v276
    %v287 = vsub.f32 %v285, %v286
    %v288 = vadd.f32 %v287, 1e-05
    %v289 = vrsqrt.pop %v288
    %v290 = vmul.f32 %v75, %v289
    %v291 = vmul.f32 %v276, %v290
    %v293 = vrot.slane %v291, 7
    %v295 = vsub.f32 %v75, %v293
    %v296 = vlaneseq
    %v297 = vshrl.u32 %v296, 7
    %v298 = vsub.s32 2, %v297
    %v299 = vrot.slane %v290, %v298
    %v300 = vmul.f32 %v266, %v299
    %v301 = vlaneseq
    %v302 = vshrl.u32 %v301, 7
    %v303 = vsub.s32 3, %v302
    %v304 = vrot.slane %v295, %v303
    %v305 = vadd.f32 %v300, %v304
    %v306 = vmax.f32 %v305, 0.0
    %v307 = vld [vmem:[#allocation8] sm:$0xff]
    %v308 = vld [vmem:[#allocation8 + $0x8] sm:$0xff]
    %v309 = vld [vmem:[#allocation8 + $0x10] sm:$0xff]
    %v310 = vld [vmem:[#allocation8 + $0x18] sm:$0xff]
    %v311 = vlaneseq
    %v312 = vshrl.u32 %v311, 7
    %v313 = vsub.s32 4, %v312
    %v314 = vrot.slane %v75, %v313
    %v316 = vsel %vm152, %v306, 0
    %318 = vmatprep.subr.mxu0 0.0
    %319 = vmatpush1.msra.mxu0 %v307
    %320 = vmatprep.subr.mxu0 0.0
    %321 = vmatpush1.msra.mxu0 %v308
    %322 = vmatprep.subr.mxu0 0.0
    %323 = vmatpush1.msra.mxu0 %v309
    %324 = vmatprep.subr.mxu0 0.0
    %325 = vmatpush1.msra.mxu0 %v310
    %326 = vmatprep.subr.mxu0 0.0
    %327 = vmatpush1.msra.mxu0 0.0
    %328 = vmatprep.subr.mxu0 0.0
    %329 = vmatpush1.msra.mxu0 0.0
    %330 = vmatprep.subr.mxu0 0.0
    %331 = vmatpush1.msra.mxu0 0.0
    %332 = vmatprep.subr.mxu0 0.0
    %333 = vmatpush1.msra.mxu0 0.0
    %334 = vmatprep.subr.mxu0 0.0
    %335 = vmatpush1.msra.mxu0 0.0
    %336 = vmatprep.subr.mxu0 0.0
    %337 = vmatpush1.msra.mxu0 0.0
    %338 = vmatprep.subr.mxu0 0.0
    %339 = vmatpush1.msra.mxu0 0.0
    %340 = vmatprep.subr.mxu0 0.0
    %341 = vmatpush1.msra.mxu0 0.0
    %342 = vmatprep.subr.mxu0 0.0
    %343 = vmatpush1.msra.mxu0 0.0
    %344 = vmatprep.subr.mxu0 0.0
    %345 = vmatpush1.msra.mxu0 0.0
    %346 = vmatprep.subr.mxu0 0.0
    %347 = vmatpush1.msra.mxu0 0.0
    %348 = vmatprep.subr.mxu0 0.0
    %349 = vmatpush1.msra.mxu0 0.0
    %350 = vmatprep.subr.mxu0 0.0
    %351 = vmatpush1.msra.mxu0 0.0
    %352 = vmatprep.subr.mxu0 0.0
    %353 = vmatpush1.msra.mxu0 0.0
    %354 = vmatprep.subr.mxu0 0.0
    %355 = vmatpush1.msra.mxu0 0.0
    %356 = vmatprep.subr.mxu0 0.0
    %357 = vmatpush1.msra.mxu0 0.0
    %358 = vmatprep.subr.mxu0 0.0
    %359 = vmatpush1.msra.mxu0 0.0
    %360 = vmatprep.subr.mxu0 0.0
    %361 = vmatpush1.msra.mxu0 0.0
    %362 = vmatprep.subr.mxu0 0.0
    %363 = vmatpush1.msra.mxu0 0.0
    %364 = vmatprep.subr.mxu0 0.0
    %365 = vmatpush1.msra.mxu0 0.0
    %366 = vmatprep.subr.mxu0 0.0
    %367 = vmatpush1.msra.mxu0 0.0
    %368 = vmatprep.subr.mxu0 0.0
    %369 = vmatpush1.msra.mxu0 0.0
    %370 = vmatprep.subr.mxu0 0.0
    %371 = vmatpush1.msra.mxu0 0.0
    %372 = vmatprep.subr.mxu0 0.0
    %373 = vmatpush1.msra.mxu0 0.0
    %374 = vmatprep.subr.mxu0 0.0
    %375 = vmatpush1.msra.mxu0 0.0
    %376 = vmatprep.subr.mxu0 0.0
    %377 = vmatpush1.msra.mxu0 0.0
    %378 = vmatprep.subr.mxu0 0.0
    %379 = vmatpush1.msra.mxu0 0.0
    %380 = vmatprep.subr.mxu0 0.0
    %381 = vmatpush1.msra.mxu0 0.0
    %382 = vmatprep.mubr.f32.mxu0 0.0
    %383 = vmatmul.mubr.f32.gmra.mrb[0].mxu0 %v316
    %v384 = vpop.f32.mrb[0].mxu0
    %v385 = vadd.f32 %v314, %v384
    %v386 = vpop.f32.mrb[0].mxu0
    %387 = vdwg.mxu0
    %v388 = vtanh.pop %v385
    %v389 = vadd.f32 %v388, 1.0
    %v390 = vmul.f32 %v389, 3.5
    %v391 = vadd.f32 %v390, -5.0
    %v392 = vlaneseq
    %v393 = vand.u32 %v392, 127
    %vm394 = vcmp.ge.s32.totalorder %v393, 4
    %vm395 = vcmp.lt.s32.totalorder %v393, 8
    %vm396 = vmand %vm394, %vm395
    %v397 = vsel %vm396, %v391, %v385
    %398 = vst [vmem:[#allocation10] sm:$0xff] %v397
    // Predicated region
    $region38: #{tpu_custom_call.1} parent=1 // pred_check
      _
    $region39: #{tpu_custom_call.1} parent=1 // pred_check_branch
      %400 = sbr.rel (0) target = $region41
    $region40: #{tpu_custom_call.1} parent=1 // pred_region
      %s402 = ssub.s32 128, 128
      %403 = vsyncadd [#allocation4], %s402
      %s405 = sshll.u32 [#allocation10], 4
      %s406 = int_to_ptr.vmem [resolvable:$true] %s405
      %408 = dma.vmem_to_hbm [thread:$0]  %s406, 128, %s5, [#allocation4]
    $region41: #{tpu_custom_call.1} parent=1 // pred_fallthru
      _
    // Predicated region
    $region42: #{tpu_custom_call.1} parent=1 // pred_check
      _
    $region43: #{tpu_custom_call.1} parent=1 // pred_check_branch
      %410 = sbr.rel (0) target = $region45
    $region44: #{tpu_custom_call.1} parent=1 // pred_region
      %411 = dma.done [#allocation4], 128
    $region45: #{tpu_custom_call.1} parent=1 // pred_fallthru
      _
    %412 = vsyncpa [#allocation3], 1
    %413 = vsyncpa [#allocation6], 1
    %414 = vsyncpa [#allocation9], 1
    %415 = vsyncpa [#allocation4], 1

</llo_original>
